<compile_context>
chip_gen: v6e
topology: v6e:2x2x1
jax: 0.10.0
libtpu: 0.0.40
codegen_flags: <defaults>
</compile_context>

<pallas_src>
import jax
import jax.numpy as jnp
from jax.experimental import pallas as pl
from jax.experimental.pallas import tpu as pltpu


def _round_up(n, m):
    return ((n + m - 1) // m) * m


def simplenet_kernel(x_ref, w1_ref, b1_ref, w2_ref, b2_ref, o_ref):
    # fc1: bf16 operands on the MXU, f32 accumulation.
    h = jnp.dot(x_ref[...], w1_ref[...], preferred_element_type=jnp.float32)
    # bias + ReLU in f32 on the VPU (v5e has no bf16 VPU datapath).
    h = jnp.maximum(h + b1_ref[...], 0.0)
    # fc2: cast the activation back to bf16 only at the matmul boundary.
    out = jnp.dot(h.astype(jnp.bfloat16), w2_ref[...],
                  preferred_element_type=jnp.float32)
    # Lane-dense (padded-to-128) store; padded columns carry zeros.
    o_ref[...] = (out + b2_ref[...]).astype(o_ref.dtype)


def simplenet_forward(x, w1, b1, w2, b2, *, block_b=256):
    """x: (B, D_in); w1: (D_in, D_hid); b1: (1, D_hid); w2: (D_hid, D_out); b2: (1, D_out)."""
    orig_dtype = x.dtype
    B, D_in = x.shape
    _, D_hid = w1.shape
    _, D_out = w2.shape

    # Lane-dense output: pad D_out up to a multiple of 128 (zero columns).
    out_pad = _round_up(D_out, 128)
    # Batch tile: large enough to fill the MXU / amortize per-step overhead,
    # but never larger than the (sublane-rounded) batch.
    tb = min(block_b, _round_up(B, 8))
    b_pad = _round_up(B, tb)

    # bf16 matmul operands; biases stay f32. Padded weight/bias columns are 0
    # so the padded output lanes are exactly b2's pad (sliced off below).
    x_p = jnp.zeros((b_pad, D_in), jnp.bfloat16).at[:B].set(x.astype(jnp.bfloat16))
    w1_b = w1.astype(jnp.bfloat16)
    b1_f = b1.astype(jnp.float32)
    w2_p = jnp.zeros((D_hid, out_pad), jnp.bfloat16).at[:, :D_out].set(
        w2.astype(jnp.bfloat16))
    b2_p = jnp.zeros((1, out_pad), jnp.float32).at[:, :D_out].set(
        b2.astype(jnp.float32))

    out = pl.pallas_call(
        simplenet_kernel,
        out_shape=jax.ShapeDtypeStruct((b_pad, out_pad), jnp.float32),
        grid=(b_pad // tb,),
        in_specs=[
            # x tiled along batch; weights/biases resident (same block every step).
            pl.BlockSpec((tb, D_in), lambda i: (i, 0)),
            pl.BlockSpec((D_in, D_hid), lambda i: (0, 0)),
            pl.BlockSpec((1, D_hid), lambda i: (0, 0)),
            pl.BlockSpec((D_hid, out_pad), lambda i: (0, 0)),
            pl.BlockSpec((1, out_pad), lambda i: (0, 0)),
        ],
        out_specs=pl.BlockSpec((tb, out_pad), lambda i: (i, 0)),
        compiler_params=pltpu.CompilerParams(
            dimension_semantics=("parallel",),  # shard batch across TCs on v7x
        ),
    )(x_p, w1_b, b1_f, w2_p, b2_p)

    return out[:B, :D_out].astype(orig_dtype)


def init_params(key, input_dim=4, hidden_dim=16, output_dim=3):
    # Mimics PyTorch nn.Linear init: U(-1/sqrt(fan_in), 1/sqrt(fan_in)).
    k1, k2, k3, k4 = jax.random.split(key, 4)
    bound1 = 1.0 / jnp.sqrt(input_dim)
    bound2 = 1.0 / jnp.sqrt(hidden_dim)
    # Stored as (in, out) so the kernel does x @ W (PyTorch stores (out, in)).
    w1 = jax.random.uniform(k1, (input_dim, hidden_dim), jnp.float32, -bound1, bound1)
    b1 = jax.random.uniform(k2, (1, hidden_dim), jnp.float32, -bound1, bound1)
    w2 = jax.random.uniform(k3, (hidden_dim, output_dim), jnp.float32, -bound2, bound2)
    b2 = jax.random.uniform(k4, (1, output_dim), jnp.float32, -bound2, bound2)
    return w1, b1, w2, b2


def _reference_bf16(x, w1, b1, w2, b2):
    # Same numerics as the kernel: bf16 matmul operands, f32 accum + elementwise.
    h = jnp.dot(x.astype(jnp.bfloat16), w1.astype(jnp.bfloat16),
                preferred_element_type=jnp.float32)
    h = jnp.maximum(h + b1, 0.0)
    o = jnp.dot(h.astype(jnp.bfloat16), w2.astype(jnp.bfloat16),
                preferred_element_type=jnp.float32)
    return o + b2


if __name__ == "__main__":
    key = jax.random.PRNGKey(0)
    k_x, k_x_big, k_p = jax.random.split(key, 3)

    D_in, D_hid, D_out = 4, 16, 3
    w1, b1, w2, b2 = init_params(k_p, D_in, D_hid, D_out)

    # 1) Spec-sized run (B=8): exercises the single-tile path.
    B_small = 8
    x_small = jax.random.normal(k_x, (B_small, D_in), jnp.float32)
    out_small = simplenet_forward(x_small, w1, b1, w2, b2)
    jax.block_until_ready(out_small)
    assert out_small.shape == (B_small, D_out)
    ref_small = _reference_bf16(x_small, w1, b1, w2, b2)
    assert jnp.allclose(out_small, ref_small, atol=1e-3, rtol=1e-3)
    # Looser sanity check against full-f32 semantics (bf16 operand rounding).
    ref_f32 = jnp.maximum(x_small @ w1 + b1, 0.0) @ w2 + b2
    assert jnp.allclose(out_small, ref_f32, atol=5e-2, rtol=5e-2)

    # 2) Larger batch (B=512): exercises batch tiling (grid=(2,) with TB=256)
    #    and the "parallel" megacore path.
    B_big = 512
    x_big = jax.random.normal(k_x_big, (B_big, D_in), jnp.float32)
    out_big = simplenet_forward(x_big, w1, b1, w2, b2)
    jax.block_until_ready(out_big)
    assert out_big.shape == (B_big, D_out)
    ref_big = _reference_bf16(x_big, w1, b1, w2, b2)
    assert jnp.allclose(out_big, ref_big, atol=1e-3, rtol=1e-3)

    print("KERNEL_OK")
</pallas_src>

<mosaic_0001>
module attributes {stable_mosaic.version = 11 : i64} {
  func.func @simplenet_kernel(%arg0: i32, %arg1: memref<8x4xbf16, #tpu.memory_space<vmem>>, %arg2: memref<4x16xbf16, #tpu.memory_space<vmem>>, %arg3: memref<1x16xf32, #tpu.memory_space<vmem>>, %arg4: memref<16x128xbf16, #tpu.memory_space<vmem>>, %arg5: memref<1x128xf32, #tpu.memory_space<vmem>>, %arg6: memref<8x128xf32, #tpu.memory_space<vmem>>) attributes {dimension_semantics = [#tpu.dimension_semantics<parallel>], iteration_bounds = array<i64: 1>, scalar_prefetch = 0 : i64, scratch_operands = 0 : i64, tpu.core_type = #tpu.core_type<tc>, window_params = [{transform_indices = @transform_0, window_bounds = array<i64: 8, 4>}, {pipeline_mode = #tpu.pipeline_mode<synchronous>, transform_indices = @transform_1, window_bounds = array<i64: 4, 16>}, {pipeline_mode = #tpu.pipeline_mode<synchronous>, transform_indices = @transform_2, window_bounds = array<i64: 1, 16>}, {pipeline_mode = #tpu.pipeline_mode<synchronous>, transform_indices = @transform_3, window_bounds = array<i64: 16, 128>}, {pipeline_mode = #tpu.pipeline_mode<synchronous>, transform_indices = @transform_4, window_bounds = array<i64: 1, 128>}, {transform_indices = @transform_5, window_bounds = array<i64: 8, 128>}]} {
    %c0 = arith.constant 0 : index
    %c0_0 = arith.constant 0 : index
    %0 = vector.load %arg1[%c0, %c0_0] : memref<8x4xbf16, #tpu.memory_space<vmem>>, vector<8x4xbf16>
    %c0_1 = arith.constant 0 : index
    %c0_2 = arith.constant 0 : index
    %1 = vector.load %arg2[%c0_1, %c0_2] : memref<4x16xbf16, #tpu.memory_space<vmem>>, vector<4x16xbf16>
    %cst = arith.constant dense<0.000000e+00> : vector<8x16xf32>
    %2 = tpu.matmul %0, %1, %cst {dimension_numbers = #tpu.dot_dimension_numbers<[1], [0], [0], [1], [0, 0, 1, 1], [], []>} : vector<8x4xbf16>, vector<4x16xbf16>, vector<8x16xf32> -> vector<8x16xf32>
    %c0_3 = arith.constant 0 : index
    %c0_4 = arith.constant 0 : index
    %3 = vector.load %arg3[%c0_3, %c0_4] : memref<1x16xf32, #tpu.memory_space<vmem>>, vector<1x16xf32>
    %4 = vector.broadcast %3 : vector<1x16xf32> to vector<8x16xf32>
    %5 = arith.addf %2, %4 : vector<8x16xf32>
    %cst_5 = arith.constant 0.000000e+00 : f32
    %6 = vector.broadcast %cst_5 : f32 to vector<8x16xf32>
    %7 = arith.maximumf %5, %6 : vector<8x16xf32>
    %8 = arith.truncf %7 : vector<8x16xf32> to vector<8x16xbf16>
    %c0_6 = arith.constant 0 : index
    %c0_7 = arith.constant 0 : index
    %9 = vector.load %arg4[%c0_6, %c0_7] : memref<16x128xbf16, #tpu.memory_space<vmem>>, vector<16x128xbf16>
    %cst_8 = arith.constant dense<0.000000e+00> : vector<8x128xf32>
    %10 = tpu.matmul %8, %9, %cst_8 {dimension_numbers = #tpu.dot_dimension_numbers<[1], [0], [0], [1], [0, 0, 1, 1], [], []>} : vector<8x16xbf16>, vector<16x128xbf16>, vector<8x128xf32> -> vector<8x128xf32>
    %c0_9 = arith.constant 0 : index
    %c0_10 = arith.constant 0 : index
    %11 = vector.load %arg5[%c0_9, %c0_10] : memref<1x128xf32, #tpu.memory_space<vmem>>, vector<1x128xf32>
    %12 = vector.broadcast %11 : vector<1x128xf32> to vector<8x128xf32>
    %13 = arith.addf %10, %12 : vector<8x128xf32>
    %c0_11 = arith.constant 0 : index
    %c0_12 = arith.constant 0 : index
    %14 = vector.load %arg6[%c0_11, %c0_12] : memref<8x128xf32, #tpu.memory_space<vmem>>, vector<8x128xf32>
    tpu.vector_store %arg6[%c0_11, %c0_12], %13 {strides = array<i32>} : memref<8x128xf32, #tpu.memory_space<vmem>>, vector<8x128xf32>,
    return
  }
  func.func @transform_0(%arg0: i32) -> (i32, i32) {
    %c0_i32 = arith.constant 0 : i32
    %c0_i32_0 = arith.constant 0 : i32
    return %arg0, %c0_i32 : i32, i32
  }
  func.func @transform_1(%arg0: i32) -> (i32, i32) {
    %c0_i32 = arith.constant 0 : i32
    %c0_i32_0 = arith.constant 0 : i32
    %c0_i32_1 = arith.constant 0 : i32
    return %c0_i32, %c0_i32_0 : i32, i32
  }
  func.func @transform_2(%arg0: i32) -> (i32, i32) {
    %c0_i32 = arith.constant 0 : i32
    %c0_i32_0 = arith.constant 0 : i32
    %c0_i32_1 = arith.constant 0 : i32
    return %c0_i32, %c0_i32_0 : i32, i32
  }
  func.func @transform_3(%arg0: i32) -> (i32, i32) {
    %c0_i32 = arith.constant 0 : i32
    %c0_i32_0 = arith.constant 0 : i32
    %c0_i32_1 = arith.constant 0 : i32
    return %c0_i32, %c0_i32_0 : i32, i32
  }
  func.func @transform_4(%arg0: i32) -> (i32, i32) {
    %c0_i32 = arith.constant 0 : i32
    %c0_i32_0 = arith.constant 0 : i32
    %c0_i32_1 = arith.constant 0 : i32
    return %c0_i32, %c0_i32_0 : i32, i32
  }
  func.func @transform_5(%arg0: i32) -> (i32, i32) {
    %c0_i32 = arith.constant 0 : i32
    %c0_i32_0 = arith.constant 0 : i32
    return %arg0, %c0_i32 : i32, i32
  }
}

</mosaic_0001>

<llo_original>
// kernel: tpu_custom_call.1
$region0: #{tpu_custom_call.1}
  #allocation0 [shape = 'u32[]', space=smem, size = 0x4, offset = 0x4, fixed_abs, tag = 'smem constant byte address 0x4 - core index']
  #allocation1 [shape = 'u32[144,128]{1,0:T(1,128)}', space=vmem, size = 0x12000, scoped, tag = 'internal scratch']
  %s0 = inlined_call_operand.vmem [shape: bf16[8,4], index: 0, kind: input, shape index: {}]
  %s1 = inlined_call_operand.vmem [shape: bf16[4,16], index: 1, kind: input, shape index: {}]
  %s2 = inlined_call_operand.vmem [shape: f32[1,16], index: 2, kind: input, shape index: {}]
  %s3 = inlined_call_operand.vmem [shape: bf16[16,128], index: 3, kind: input, shape index: {}]
  %s4 = inlined_call_operand.vmem [shape: f32[1,128], index: 4, kind: input, shape index: {}]
  %s5 = inlined_call_operand.hbm [shape: f32[8,128], index: 5, kind: output, shape index: {}]
  %s6 = sld [smem:[#allocation0]]
  $region30: #{tpu_custom_call.1} parent=0
    _
  %s8 = ssub.s32 1, %s6
  %s9 = scalar_select 0, %s8, %s6
  $region1: #{tpu_custom_call.1} parent=0
    #allocation2 [shape = 'u8[4096]{0}', space=vmem, size = 0x1000, scoped, tag = 'output window, operand 0, single buffered']
    #allocation3 [shape = 's32[1]{0}', space=sflag, size = 0x4, scoped, tag = 'scoped memory for tpu_custom_call.1']
    %10 = vsyncpa [#allocation3], 0
    // Predicated region
    $region2: #{tpu_custom_call.1} parent=1 // pred_check
      _
    $region3: #{tpu_custom_call.1} parent=1 // pred_check_branch
      %12 = sbr.rel (0) target = $region5
    $region4: #{tpu_custom_call.1} parent=1 // pred_region
      _
    $region5: #{tpu_custom_call.1} parent=1 // pred_fallthru
      _
    // Predicated region
    $region6: #{tpu_custom_call.1} parent=1 // pred_check
      _
    $region7: #{tpu_custom_call.1} parent=1 // pred_check_branch
      %14 = sbr.rel (0) target = $region9
    $region8: #{tpu_custom_call.1} parent=1 // pred_region
      _
    $region9: #{tpu_custom_call.1} parent=1 // pred_fallthru
      _
    // Predicated region
    $region10: #{tpu_custom_call.1} parent=1 // pred_check
      _
    $region11: #{tpu_custom_call.1} parent=1 // pred_check_branch
      %16 = sbr.rel (0) target = $region13
    $region12: #{tpu_custom_call.1} parent=1 // pred_region
      _
    $region13: #{tpu_custom_call.1} parent=1 // pred_fallthru
      _
    // Predicated region
    $region14: #{tpu_custom_call.1} parent=1 // pred_check
      _
    $region15: #{tpu_custom_call.1} parent=1 // pred_check_branch
      %18 = sbr.rel (0) target = $region17
    $region16: #{tpu_custom_call.1} parent=1 // pred_region
      _
    $region17: #{tpu_custom_call.1} parent=1 // pred_fallthru
      _
    // Predicated region
    $region18: #{tpu_custom_call.1} parent=1 // pred_check
      _
    $region19: #{tpu_custom_call.1} parent=1 // pred_check_branch
      %20 = sbr.rel (0) target = $region21
    $region20: #{tpu_custom_call.1} parent=1 // pred_region
      _
    $region21: #{tpu_custom_call.1} parent=1 // pred_fallthru
      _
    %v22 = vld [vmem:[%s0] sm:$0xf]
    %v23 = vld [vmem:[%s1] sm:$0x3]
    %v24 = vld [vmem:[%s2] sm:$0x1]
    %v26 = vlaneseq
    %v27 = vshrl.u32 %v26, 7
    %v28 = vsub.s32 0, %v27
    %v29 = vrot.slane %v24, %v28
    %vm31 = vcmask 31744
    %v33 = vsel %vm31, %v22, 0
    %vm35 = vcmask 1041408
    %v37 = vsel %vm35, %v23, 0
    %39 = vmatprep.subr.bf16.mxu0 0
    %40 = vmatpush1.bf16.msra.mxu0 0
    %41 = vmatprep.subr.bf16.mxu0 0
    %42 = vmatpush1.bf16.msra.mxu0 0
    %43 = vmatprep.subr.bf16.mxu0 0
    %44 = vmatpush1.bf16.msra.mxu0 0
    %45 = vmatprep.subr.bf16.mxu0 0
    %46 = vmatpush1.bf16.msra.mxu0 0
    %47 = vmatprep.subr.bf16.mxu0 0
    %48 = vmatpush1.bf16.msra.mxu0 0
    %49 = vmatprep.subr.bf16.mxu0 0
    %50 = vmatpush1.bf16.msra.mxu0 0
    %51 = vmatprep.subr.bf16.mxu0 0
    %52 = vmatpush1.bf16.msra.mxu0 0
    %53 = vmatprep.subr.bf16.mxu0 0
    %54 = vmatpush1.bf16.msra.mxu0 %v37
    %55 = vmatprep.subr.bf16.mxu0 0
    %56 = vmatpush2.bf16.msra.mxu0 0
    %57 = vmatprep.subr.bf16.mxu0 0
    %58 = vmatpush2.bf16.msra.mxu0 0
    %59 = vmatprep.subr.bf16.mxu0 0
    %60 = vmatpush2.bf16.msra.mxu0 0
    %61 = vmatprep.subr.bf16.mxu0 0
    %62 = vmatpush2.bf16.msra.mxu0 0
    %63 = vmatprep.subr.bf16.mxu0 0
    %64 = vmatpush2.bf16.msra.mxu0 0
    %65 = vmatprep.subr.bf16.mxu0 0
    %66 = vmatpush2.bf16.msra.mxu0 0
    %67 = vmatprep.subr.bf16.mxu0 0
    %68 = vmatpush2.bf16.msra.mxu0 0
    %69 = vmatprep.subr.bf16.mxu0 0
    %70 = vmatpush2.bf16.msra.mxu0 0
    %71 = vmatprep.mubr.bf16.mxu0 0
    %72 = vmatmul.mubr.bf16.gmra.mxu0 %v33
    %v73 = vpop.f32.mrf.mxu0
    %v74 = vadd.f32 %v29, %v73
    %v75 = vpop.f32.mrf.mxu0
    %v76 = vpop.f32.mrf.mxu0
    %v77 = vpop.f32.mrf.mxu0
    %78 = vdwg.mxu0
    %v79 = vmax.f32 %v74, 0.0
    %v80 = vpack.c.bf16 %v79, %v79
    %v81 = vld [vmem:[%s3] sm:$0xf]
    %v82 = vld [vmem:[%s3 + $0x4] sm:$0xf]
    %v83 = vld [vmem:[%s4] sm:$0x1]
    %v85 = vlaneseq
    %v86 = vshrl.u32 %v85, 7
    %v87 = vsub.s32 0, %v86
    %v88 = vrot.slane %v83, %v87
    %v92 = vunpack.c.l.b16 %v81
    %v93 = vunpack.c.l.b16 %v82
    %v94 = vpack.c.b16 %v93, %v92
    %vm96 = vcmask 130048
    %v98 = vsel %vm96, %v80, 0
    %100 = vmatprep.subr.bf16.mxu0 0
    %101 = vmatpush1.bf16.msra.mxu0 0
    %102 = vmatprep.subr.bf16.mxu0 0
    %103 = vmatpush1.bf16.msra.mxu0 0
    %104 = vmatprep.subr.bf16.mxu0 0
    %105 = vmatpush1.bf16.msra.mxu0 0
    %106 = vmatprep.subr.bf16.mxu0 0
    %107 = vmatpush1.bf16.msra.mxu0 0
    %108 = vmatprep.subr.bf16.mxu0 0
    %109 = vmatpush1.bf16.msra.mxu0 0
    %110 = vmatprep.subr.bf16.mxu0 0
    %111 = vmatpush1.bf16.msra.mxu0 0
    %112 = vmatprep.subr.bf16.mxu0 0
    %113 = vmatpush1.bf16.msra.mxu0 0
    %114 = vmatprep.subr.bf16.mxu0 0
    %115 = vmatpush1.bf16.msra.mxu0 %v94
    %116 = vmatprep.subr.bf16.mxu0 0
    %117 = vmatpush2.bf16.msra.mxu0 0
    %118 = vmatprep.subr.bf16.mxu0 0
    %119 = vmatpush2.bf16.msra.mxu0 0
    %120 = vmatprep.subr.bf16.mxu0 0
    %121 = vmatpush2.bf16.msra.mxu0 0
    %122 = vmatprep.subr.bf16.mxu0 0
    %123 = vmatpush2.bf16.msra.mxu0 0
    %124 = vmatprep.subr.bf16.mxu0 0
    %125 = vmatpush2.bf16.msra.mxu0 0
    %126 = vmatprep.subr.bf16.mxu0 0
    %127 = vmatpush2.bf16.msra.mxu0 0
    %128 = vmatprep.subr.bf16.mxu0 0
    %129 = vmatpush2.bf16.msra.mxu0 0
    %130 = vmatprep.subr.bf16.mxu0 0
    %131 = vmatpush2.bf16.msra.mxu0 0
    %132 = vmatprep.mubr.bf16.mxu0 0
    %133 = vmatmul.mubr.bf16.gmra.mxu0 %v98
    %v134 = vpop.f32.mrf.mxu0
    %v135 = vadd.f32 %v88, %v134
    %v136 = vpop.f32.mrf.mxu0
    %v137 = vpop.f32.mrf.mxu0
    %v138 = vpop.f32.mrf.mxu0
    %139 = vdwg.mxu0
    %140 = vst [vmem:[#allocation2] sm:$0xff] %v135
    // Predicated region
    $region22: #{tpu_custom_call.1} parent=1 // pred_check
      _
    $region23: #{tpu_custom_call.1} parent=1 // pred_check_branch
      %142 = sbr.rel (0) target = $region25
    $region24: #{tpu_custom_call.1} parent=1 // pred_region
      %s144 = ssub.s32 128, 128
      %145 = vsyncadd [#allocation3], %s144
      %s147 = sshll.u32 [#allocation2], 4
      %s148 = int_to_ptr.vmem [resolvable:$true] %s147
      %150 = dma.vmem_to_hbm [thread:$0]  %s148, 128, %s5, [#allocation3]
    $region25: #{tpu_custom_call.1} parent=1 // pred_fallthru
      _
    // Predicated region
    $region26: #{tpu_custom_call.1} parent=1 // pred_check
      _
    $region27: #{tpu_custom_call.1} parent=1 // pred_check_branch
      %152 = sbr.rel (0) target = $region29
    $region28: #{tpu_custom_call.1} parent=1 // pred_region
      %153 = dma.done [#allocation3], 128
    $region29: #{tpu_custom_call.1} parent=1 // pred_fallthru
      _
    %154 = vsyncpa [#allocation3], 1

</llo_original>
